<compile_context>
chip_gen: v5e
topology: v5e:2x2
jax: 0.10.0
libtpu: 0.0.40
codegen_flags: <defaults>
</compile_context>

<pallas_src>
import functools

import jax
import jax.numpy as jnp
from jax.experimental import pallas as pl
from jax.experimental.pallas import tpu as pltpu

LANES = 128   # vreg lane width
BP = 8        # padded batch  = one sublane tile
DP = 8        # padded input feature dim (true D=4)

# Lane offsets of the 128-wide column blocks inside the packed slab.
_WIH, _WHH, _W1, _W2, _W3, _VEC = (i * LANES for i in range(6))
SLAB_W = 6 * LANES


# -----------------------------------------------------------------------------
# Kernel: whole forward pass (recurrence + MLP head) in one gridless call.
# -----------------------------------------------------------------------------
def rnn_mlp_kernel(x_ref, h0_ref, slab_ref, out_ref):
    # x_ref:   (T*BP, DP)  time-major, batch- and feature-padded input
    # h0_ref:  (BP, H)     padded initial hidden state
    # slab_ref:(H, 6*128)  packed parameters
    # out_ref: (BP, 1)
    T = x_ref.shape[0] // BP

    # --- static unpack of the parameter slab (zero runtime cost) ------------
    wih  = slab_ref[0:DP, _WIH:_WIH + LANES]     # (DP, H); rows >= 4 are zero
    whh  = slab_ref[:,    _WHH:_WHH + LANES]     # (H, H)
    w1   = slab_ref[:,    _W1:_W1 + LANES]       # (H, 128)
    w2   = slab_ref[:,    _W2:_W2 + LANES]       # (128,128); lanes >= 64 zero
    w3   = slab_ref[:,    _W3:_W3 + LANES]       # (128,128); lanes >= 16 zero
    brnn = slab_ref[0:1,  _VEC:_VEC + LANES]     # (1,128)  merged b_ih + b_hh
    b1   = slab_ref[1:2,  _VEC:_VEC + LANES]
    b2   = slab_ref[2:3,  _VEC:_VEC + LANES]     # lanes >= 64 zero
    b3   = slab_ref[3:4,  _VEC:_VEC + LANES]     # lanes >= 16 zero
    wo   = slab_ref[4:5,  _VEC:_VEC + LANES]     # output weight row, padded
    bo   = slab_ref[5:6,  _VEC:_VEC + LANES]     # bo at lane 0, rest zero

    # --- hoisted input projection: one (T*BP, DP) @ (DP, H) matmul ----------
    xproj = jnp.dot(x_ref[...], wih,
                    preferred_element_type=jnp.float32) + brnn   # (T*BP, H)

    # --- tanh recurrence: h_t = tanh(xproj_t + h_{t-1} @ Whh) ---------------
    # Fully unrolled (T static); each xproj slice is exactly one (8,128) vreg.
    h = h0_ref[...]                                               # (BP, H)
    for t in range(T):
        pre = xproj[t * BP:(t + 1) * BP, :] + jnp.dot(
            h, whh, preferred_element_type=jnp.float32)
        h = jnp.tanh(pre)

    # --- ReLU FC head at full 128-lane width (padded lanes stay exactly 0) --
    a = jnp.maximum(
        jnp.dot(h, w1, preferred_element_type=jnp.float32) + b1, 0.0)
    a = jnp.maximum(
        jnp.dot(a, w2, preferred_element_type=jnp.float32) + b2, 0.0)
    a = jnp.maximum(
        jnp.dot(a, w3, preferred_element_type=jnp.float32) + b3, 0.0)

    # --- output layer (output_size == 1): mul + lane reduce on the XLU ------
    # bo is nonzero only at lane 0, so the reduce folds the bias in for free.
    out_ref[...] = jnp.sum(a * wo + bo, axis=-1, keepdims=True)


# -----------------------------------------------------------------------------
# Parameter packing (done ONCE, outside jit) and wrapper
# -----------------------------------------------------------------------------
def _pad_to(a, shape):
    a = jnp.asarray(a, jnp.float32)
    pad = [(0, s - d) for d, s in zip(a.shape, shape)]
    return jnp.pad(a, pad)


def pack_params(params, hidden_size=128):
    """Pack all weights/biases into one (H, 6*128) f32 slab."""
    wih, whh, brnn, w1, b1, w2, b2, w3, b3, wo, bo = params
    H = hidden_size
    assert H == LANES, "kernel layout assumes hidden_size == 128"

    blk_wih = _pad_to(wih, (H, LANES))
    blk_whh = _pad_to(whh, (H, LANES))
    blk_w1  = _pad_to(w1,  (H, LANES))
    blk_w2  = _pad_to(w2,  (H, LANES))
    blk_w3  = _pad_to(w3,  (H, LANES))

    vec_rows = jnp.concatenate([
        _pad_to(brnn.reshape(1, -1), (1, LANES)),
        _pad_to(b1.reshape(1, -1),   (1, LANES)),
        _pad_to(b2.reshape(1, -1),   (1, LANES)),
        _pad_to(b3.reshape(1, -1),   (1, LANES)),
        _pad_to(wo.reshape(1, -1),   (1, LANES)),
        _pad_to(bo.reshape(1, -1),   (1, LANES)),
    ], axis=0)                                     # (6, 128)
    blk_vec = _pad_to(vec_rows, (H, LANES))

    slab = jnp.concatenate(
        [blk_wih, blk_whh, blk_w1, blk_w2, blk_w3, blk_vec], axis=1)
    assert slab.shape == (H, SLAB_W)
    return slab


@jax.jit
def rnn_forward(x, h0, slab):
    """x: (B, T, D_in) batch_first (PyTorch convention); h0: (B, H);
    slab: packed parameters from pack_params."""
    B, T, D = x.shape
    assert B <= BP and D <= DP

    # Layout plumbing in the wrapper: time-major, pad batch->8, feat->8, 2-D.
    x_tm = jnp.transpose(x, (1, 0, 2))                          # (T, B, D)
    x_pad = jnp.pad(x_tm, ((0, 0), (0, BP - B), (0, DP - D)))   # (T, BP, DP)
    x2d = x_pad.reshape(T * BP, DP)                             # (T*BP, DP)
    h0_pad = jnp.pad(h0, ((0, BP - B), (0, 0)))                 # (BP, H)

    out = pl.pallas_call(
        rnn_mlp_kernel,
        out_shape=jax.ShapeDtypeStruct((BP, 1), jnp.float32),
        in_specs=[pl.BlockSpec(memory_space=pltpu.MemorySpace.VMEM)] * 3,
        out_specs=pl.BlockSpec(memory_space=pltpu.MemorySpace.VMEM),
    )(x2d, h0_pad, slab)
    return out[:B]


# -----------------------------------------------------------------------------
# Init + pure-JAX reference
# -----------------------------------------------------------------------------
def init_params(key, input_size=4, hidden_size=128,
                fc_size=(128, 64, 16), output_size=1):
    """Deterministic init, PyTorch-style U(-1/sqrt(fan_in), 1/sqrt(fan_in))."""
    assert output_size == 1, "kernel output head is specialised to output_size=1"
    keys = jax.random.split(key, 12)

    def unif(k, shape, fan_in):
        bound = 1.0 / jnp.sqrt(jnp.float32(fan_in))
        return jax.random.uniform(k, shape, jnp.float32, -bound, bound)

    H = hidden_size
    # RNN params stored as (fan_in, fan_out); biases merged b_ih + b_hh.
    wih = unif(keys[0], (input_size, H), H)
    whh = unif(keys[1], (H, H), H)
    brnn = unif(keys[2], (1, H), H) + unif(keys[3], (1, H), H)
    f1, f2, f3 = fc_size
    w1 = unif(keys[4], (H, f1), H)
    b1 = unif(keys[5], (1, f1), H)
    w2 = unif(keys[6], (f1, f2), f1)
    b2 = unif(keys[7], (1, f2), f1)
    w3 = unif(keys[8], (f2, f3), f2)
    b3 = unif(keys[9], (1, f3), f2)
    wo = unif(keys[10], (1, f3), f3)
    bo = unif(keys[11], (1, output_size), f3)
    return (wih, whh, brnn, w1, b1, w2, b2, w3, b3, wo, bo)


def reference_forward(x, h0, params):
    """Pure-JAX reference mirroring torch.nn.RNN + Linear/ReLU head."""
    wih, whh, brnn, w1, b1, w2, b2, w3, b3, wo, bo = params
    h = h0
    for t in range(x.shape[1]):
        h = jnp.tanh(x[:, t, :] @ wih + h @ whh + brnn)
    a = jax.nn.relu(h @ w1 + b1)
    a = jax.nn.relu(a @ w2 + b2)
    a = jax.nn.relu(a @ w3 + b3)
    return jnp.sum(a * wo, axis=-1, keepdims=True) + bo


if __name__ == "__main__":
    B, T, D_IN, HIDDEN = 2, 8, 4, 128
    FC_SIZE = (128, 64, 16)
    OUT = 1

    key = jax.random.PRNGKey(0)
    k_x, k_h, k_p = jax.random.split(key, 3)

    x = jax.random.normal(k_x, (B, T, D_IN), jnp.float32)
    # PyTorch forward draws h_0 = randn(num_layers, B, hidden); num_layers=1.
    h0 = jax.random.normal(k_h, (1, B, HIDDEN), jnp.float32)[0]   # (B, H)
    params = init_params(k_p, D_IN, HIDDEN, FC_SIZE, OUT)
    slab = pack_params(params, HIDDEN)          # packed once, outside jit

    out = jax.block_until_ready(rnn_forward(x, h0, slab))

    ref = reference_forward(x, h0, params)
    assert out.shape == (B, OUT)
    assert jnp.allclose(out, ref, rtol=1e-5, atol=1e-5), (out, ref)

    print("KERNEL_OK")
</pallas_src>

<mosaic_0001>
module attributes {stable_mosaic.version = 11 : i64} {
  func.func @rnn_mlp_kernel(%arg0: memref<64x8xf32, #tpu.memory_space<vmem>>, %arg1: memref<8x128xf32, #tpu.memory_space<vmem>>, %arg2: memref<128x768xf32, #tpu.memory_space<vmem>>, %arg3: memref<8x1xf32, #tpu.memory_space<vmem>>) attributes {dimension_semantics = [], scalar_prefetch = 0 : i64, scratch_operands = 0 : i64, tpu.core_type = #tpu.core_type<tc>} {
    %c0 = arith.constant 0 : index
    %c0_0 = arith.constant 0 : index
    %0 = vector.load %arg2[%c0, %c0_0] : memref<128x768xf32, #tpu.memory_space<vmem>>, vector<8x128xf32>
    %c0_1 = arith.constant 0 : index
    %c128 = arith.constant 128 : index
    %1 = vector.load %arg2[%c0_1, %c128] : memref<128x768xf32, #tpu.memory_space<vmem>>, vector<128x128xf32>
    %c0_2 = arith.constant 0 : index
    %c256 = arith.constant 256 : index
    %2 = vector.load %arg2[%c0_2, %c256] : memref<128x768xf32, #tpu.memory_space<vmem>>, vector<128x128xf32>
    %c0_3 = arith.constant 0 : index
    %c384 = arith.constant 384 : index
    %3 = vector.load %arg2[%c0_3, %c384] : memref<128x768xf32, #tpu.memory_space<vmem>>, vector<128x128xf32>
    %c0_4 = arith.constant 0 : index
    %c512 = arith.constant 512 : index
    %4 = vector.load %arg2[%c0_4, %c512] : memref<128x768xf32, #tpu.memory_space<vmem>>, vector<128x128xf32>
    %c0_5 = arith.constant 0 : index
    %c640 = arith.constant 640 : index
    %5 = vector.load %arg2[%c0_5, %c640] : memref<128x768xf32, #tpu.memory_space<vmem>>, vector<1x128xf32>
    %c1 = arith.constant 1 : index
    %c640_6 = arith.constant 640 : index
    %6 = vector.load %arg2[%c1, %c640_6] : memref<128x768xf32, #tpu.memory_space<vmem>>, vector<1x128xf32>
    %c2 = arith.constant 2 : index
    %c640_7 = arith.constant 640 : index
    %7 = vector.load %arg2[%c2, %c640_7] : memref<128x768xf32, #tpu.memory_space<vmem>>, vector<1x128xf32>
    %c3 = arith.constant 3 : index
    %c640_8 = arith.constant 640 : index
    %8 = vector.load %arg2[%c3, %c640_8] : memref<128x768xf32, #tpu.memory_space<vmem>>, vector<1x128xf32>
    %c4 = arith.constant 4 : index
    %c640_9 = arith.constant 640 : index
    %9 = vector.load %arg2[%c4, %c640_9] : memref<128x768xf32, #tpu.memory_space<vmem>>, vector<1x128xf32>
    %c5 = arith.constant 5 : index
    %c640_10 = arith.constant 640 : index
    %10 = vector.load %arg2[%c5, %c640_10] : memref<128x768xf32, #tpu.memory_space<vmem>>, vector<1x128xf32>
    %c0_11 = arith.constant 0 : index
    %c0_12 = arith.constant 0 : index
    %11 = vector.load %arg0[%c0_11, %c0_12] : memref<64x8xf32, #tpu.memory_space<vmem>>, vector<64x8xf32>
    %cst = arith.constant dense<0.000000e+00> : vector<64x128xf32>
    %12 = tpu.matmul %11, %0, %cst {dimension_numbers = #tpu.dot_dimension_numbers<[1], [0], [0], [1], [0, 0, 1, 1], [], []>} : vector<64x8xf32>, vector<8x128xf32>, vector<64x128xf32> -> vector<64x128xf32>
    %13 = vector.broadcast %5 : vector<1x128xf32> to vector<64x128xf32>
    %14 = arith.addf %12, %13 : vector<64x128xf32>
    %c0_13 = arith.constant 0 : index
    %c0_14 = arith.constant 0 : index
    %15 = vector.load %arg1[%c0_13, %c0_14] : memref<8x128xf32, #tpu.memory_space<vmem>>, vector<8x128xf32>
    %16 = vector.extract_strided_slice %14 {offsets = [0, 0], sizes = [8, 128], strides = [1, 1]} : vector<64x128xf32> to vector<8x128xf32>
    %cst_15 = arith.constant dense<0.000000e+00> : vector<8x128xf32>
    %17 = tpu.matmul %15, %1, %cst_15 {dimension_numbers = #tpu.dot_dimension_numbers<[1], [0], [0], [1], [0, 0, 1, 1], [], []>} : vector<8x128xf32>, vector<128x128xf32>, vector<8x128xf32> -> vector<8x128xf32>
    %18 = arith.addf %16, %17 : vector<8x128xf32>
    %19 = math.tanh %18 : vector<8x128xf32>
    %20 = vector.extract_strided_slice %14 {offsets = [8, 0], sizes = [8, 128], strides = [1, 1]} : vector<64x128xf32> to vector<8x128xf32>
    %cst_16 = arith.constant dense<0.000000e+00> : vector<8x128xf32>
    %21 = tpu.matmul %19, %1, %cst_16 {dimension_numbers = #tpu.dot_dimension_numbers<[1], [0], [0], [1], [0, 0, 1, 1], [], []>} : vector<8x128xf32>, vector<128x128xf32>, vector<8x128xf32> -> vector<8x128xf32>
    %22 = arith.addf %20, %21 : vector<8x128xf32>
    %23 = math.tanh %22 : vector<8x128xf32>
    %24 = vector.extract_strided_slice %14 {offsets = [16, 0], sizes = [8, 128], strides = [1, 1]} : vector<64x128xf32> to vector<8x128xf32>
    %cst_17 = arith.constant dense<0.000000e+00> : vector<8x128xf32>
    %25 = tpu.matmul %23, %1, %cst_17 {dimension_numbers = #tpu.dot_dimension_numbers<[1], [0], [0], [1], [0, 0, 1, 1], [], []>} : vector<8x128xf32>, vector<128x128xf32>, vector<8x128xf32> -> vector<8x128xf32>
    %26 = arith.addf %24, %25 : vector<8x128xf32>
    %27 = math.tanh %26 : vector<8x128xf32>
    %28 = vector.extract_strided_slice %14 {offsets = [24, 0], sizes = [8, 128], strides = [1, 1]} : vector<64x128xf32> to vector<8x128xf32>
    %cst_18 = arith.constant dense<0.000000e+00> : vector<8x128xf32>
    %29 = tpu.matmul %27, %1, %cst_18 {dimension_numbers = #tpu.dot_dimension_numbers<[1], [0], [0], [1], [0, 0, 1, 1], [], []>} : vector<8x128xf32>, vector<128x128xf32>, vector<8x128xf32> -> vector<8x128xf32>
    %30 = arith.addf %28, %29 : vector<8x128xf32>
    %31 = math.tanh %30 : vector<8x128xf32>
    %32 = vector.extract_strided_slice %14 {offsets = [32, 0], sizes = [8, 128], strides = [1, 1]} : vector<64x128xf32> to vector<8x128xf32>
    %cst_19 = arith.constant dense<0.000000e+00> : vector<8x128xf32>
    %33 = tpu.matmul %31, %1, %cst_19 {dimension_numbers = #tpu.dot_dimension_numbers<[1], [0], [0], [1], [0, 0, 1, 1], [], []>} : vector<8x128xf32>, vector<128x128xf32>, vector<8x128xf32> -> vector<8x128xf32>
    %34 = arith.addf %32, %33 : vector<8x128xf32>
    %35 = math.tanh %34 : vector<8x128xf32>
    %36 = vector.extract_strided_slice %14 {offsets = [40, 0], sizes = [8, 128], strides = [1, 1]} : vector<64x128xf32> to vector<8x128xf32>
    %cst_20 = arith.constant dense<0.000000e+00> : vector<8x128xf32>
    %37 = tpu.matmul %35, %1, %cst_20 {dimension_numbers = #tpu.dot_dimension_numbers<[1], [0], [0], [1], [0, 0, 1, 1], [], []>} : vector<8x128xf32>, vector<128x128xf32>, vector<8x128xf32> -> vector<8x128xf32>
    %38 = arith.addf %36, %37 : vector<8x128xf32>
    %39 = math.tanh %38 : vector<8x128xf32>
    %40 = vector.extract_strided_slice %14 {offsets = [48, 0], sizes = [8, 128], strides = [1, 1]} : vector<64x128xf32> to vector<8x128xf32>
    %cst_21 = arith.constant dense<0.000000e+00> : vector<8x128xf32>
    %41 = tpu.matmul %39, %1, %cst_21 {dimension_numbers = #tpu.dot_dimension_numbers<[1], [0], [0], [1], [0, 0, 1, 1], [], []>} : vector<8x128xf32>, vector<128x128xf32>, vector<8x128xf32> -> vector<8x128xf32>
    %42 = arith.addf %40, %41 : vector<8x128xf32>
    %43 = math.tanh %42 : vector<8x128xf32>
    %44 = vector.extract_strided_slice %14 {offsets = [56, 0], sizes = [8, 128], strides = [1, 1]} : vector<64x128xf32> to vector<8x128xf32>
    %cst_22 = arith.constant dense<0.000000e+00> : vector<8x128xf32>
    %45 = tpu.matmul %43, %1, %cst_22 {dimension_numbers = #tpu.dot_dimension_numbers<[1], [0], [0], [1], [0, 0, 1, 1], [], []>} : vector<8x128xf32>, vector<128x128xf32>, vector<8x128xf32> -> vector<8x128xf32>
    %46 = arith.addf %44, %45 : vector<8x128xf32>
    %47 = math.tanh %46 : vector<8x128xf32>
    %cst_23 = arith.constant dense<0.000000e+00> : vector<8x128xf32>
    %48 = tpu.matmul %47, %2, %cst_23 {dimension_numbers = #tpu.dot_dimension_numbers<[1], [0], [0], [1], [0, 0, 1, 1], [], []>} : vector<8x128xf32>, vector<128x128xf32>, vector<8x128xf32> -> vector<8x128xf32>
    %49 = vector.broadcast %6 : vector<1x128xf32> to vector<8x128xf32>
    %50 = arith.addf %48, %49 : vector<8x128xf32>
    %cst_24 = arith.constant 0.000000e+00 : f32
    %51 = vector.broadcast %cst_24 : f32 to vector<8x128xf32>
    %52 = arith.maximumf %50, %51 : vector<8x128xf32>
    %cst_25 = arith.constant dense<0.000000e+00> : vector<8x128xf32>
    %53 = tpu.matmul %52, %3, %cst_25 {dimension_numbers = #tpu.dot_dimension_numbers<[1], [0], [0], [1], [0, 0, 1, 1], [], []>} : vector<8x128xf32>, vector<128x128xf32>, vector<8x128xf32> -> vector<8x128xf32>
    %54 = vector.broadcast %7 : vector<1x128xf32> to vector<8x128xf32>
    %55 = arith.addf %53, %54 : vector<8x128xf32>
    %cst_26 = arith.constant 0.000000e+00 : f32
    %56 = vector.broadcast %cst_26 : f32 to vector<8x128xf32>
    %57 = arith.maximumf %55, %56 : vector<8x128xf32>
    %cst_27 = arith.constant dense<0.000000e+00> : vector<8x128xf32>
    %58 = tpu.matmul %57, %4, %cst_27 {dimension_numbers = #tpu.dot_dimension_numbers<[1], [0], [0], [1], [0, 0, 1, 1], [], []>} : vector<8x128xf32>, vector<128x128xf32>, vector<8x128xf32> -> vector<8x128xf32>
    %59 = vector.broadcast %8 : vector<1x128xf32> to vector<8x128xf32>
    %60 = arith.addf %58, %59 : vector<8x128xf32>
    %cst_28 = arith.constant 0.000000e+00 : f32
    %61 = vector.broadcast %cst_28 : f32 to vector<8x128xf32>
    %62 = arith.maximumf %60, %61 : vector<8x128xf32>
    %63 = vector.broadcast %9 : vector<1x128xf32> to vector<8x128xf32>
    %64 = arith.mulf %62, %63 : vector<8x128xf32>
    %65 = vector.broadcast %10 : vector<1x128xf32> to vector<8x128xf32>
    %66 = arith.addf %64, %65 : vector<8x128xf32>
    %cst_29 = arith.constant dense<0.000000e+00> : vector<8xf32>
    %67 = vector.multi_reduction <add>, %66, %cst_29 [1] : vector<8x128xf32> to vector<8xf32>
    %68 = vector.shape_cast %67 : vector<8xf32> to vector<8x1xf32>
    %c0_30 = arith.constant 0 : index
    %c0_31 = arith.constant 0 : index
    %69 = vector.load %arg3[%c0_30, %c0_31] : memref<8x1xf32, #tpu.memory_space<vmem>>, vector<8x1xf32>
    tpu.vector_store %arg3[%c0_30, %c0_31], %68 {strides = array<i32>} : memref<8x1xf32, #tpu.memory_space<vmem>>, vector<8x1xf32>,
    return
  }
}

</mosaic_0001>

<llo_original>
// kernel: rnn_forward.1
$region0: #{rnn_forward.1}
  #allocation0 [shape = 'u32[]', space=smem, size = 0x4, offset = 0x4, fixed_abs, tag = 'smem constant byte address 0x4 - core index']
  #allocation1 [shape = 'u32[72,128]{1,0:T(1,128)}', space=vmem, size = 0x9000, scoped, tag = 'internal scratch']
  %s0 = inlined_call_operand.vmem [shape: f32[64,8], index: 0, kind: input, shape index: {}]
  %s1 = inlined_call_operand.vmem [shape: f32[8,128], index: 1, kind: input, shape index: {}]
  %s2 = inlined_call_operand.hbm [shape: f32[128,768], index: 2, kind: input, shape index: {}]
  %s3 = inlined_call_operand.vmem [shape: f32[8,1], index: 3, kind: output, shape index: {}]
  %s4 = sld [smem:[#allocation0]]
  $region26: #{rnn_forward.1} parent=0
    _
  %s6 = ssub.s32 1, %s4
  %s7 = scalar_select 0, %s6, %s4
  $region1: #{rnn_forward.1} parent=0
    #allocation2 [shape = 'u8[393216]{0}', space=vmem, size = 0x60000, scoped, tag = 'input window, operand 2, single buffered']
    #allocation3 [shape = 's32[1]{0}', space=sflag, size = 0x4, scoped, tag = 'scoped memory for rnn_forward.1']
    %8 = vsyncpa [#allocation3], 0
    // Predicated region
    $region2: #{rnn_forward.1} parent=1 // pred_check
      _
    $region3: #{rnn_forward.1} parent=1 // pred_check_branch
      %10 = sbr.rel (0) target = $region5
    $region4: #{rnn_forward.1} parent=1 // pred_region
      _
    $region5: #{rnn_forward.1} parent=1 // pred_fallthru
      _
    // Predicated region
    $region6: #{rnn_forward.1} parent=1 // pred_check
      _
    $region7: #{rnn_forward.1} parent=1 // pred_check_branch
      %12 = sbr.rel (0) target = $region9
    $region8: #{rnn_forward.1} parent=1 // pred_region
      _
    $region9: #{rnn_forward.1} parent=1 // pred_fallthru
      _
    // Predicated region
    $region10: #{rnn_forward.1} parent=1 // pred_check
      _
    $region11: #{rnn_forward.1} parent=1 // pred_check_branch
      %14 = sbr.rel (0) target = $region13
    $region12: #{rnn_forward.1} parent=1 // pred_region
      %16 = vsyncadd [#allocation3], 0
      %s17 = sshll.u32 %s2, 4
      %s18 = int_to_ptr.hbm [resolvable:$true] %s17
      %s19 = sshll.u32 [#allocation2], 4
      %s20 = int_to_ptr.vmem [resolvable:$true] %s19
      %25 = dma.hbm_to_vmem [thread:$0]  %s18, 12288, %s20, [#allocation3], 768, 768, 48
    $region13: #{rnn_forward.1} parent=1 // pred_fallthru
      _
    // Predicated region
    $region14: #{rnn_forward.1} parent=1 // pred_check
      _
    $region15: #{rnn_forward.1} parent=1 // pred_check_branch
      %27 = sbr.rel (0) target = $region17
    $region16: #{rnn_forward.1} parent=1 // pred_region
      %29 = dma.done [#allocation3], 12288
    $region17: #{rnn_forward.1} parent=1 // pred_fallthru
      _
    %v30 = vld [vmem:[#allocation2] sm:$0xff]
    %v31 = vld [vmem:[#allocation2 + $0x8] sm:$0xff]
    %v32 = vld [vmem:[#allocation2 + $0x38] sm:$0xff]
    %v33 = vld [vmem:[#allocation2 + $0x68] sm:$0xff]
    %v34 = vld [vmem:[#allocation2 + $0x98] sm:$0xff]
    %v35 = vld [vmem:[#allocation2 + $0xc8] sm:$0xff]
    %v36 = vld [vmem:[#allocation2 + $0xf8] sm:$0xff]
    %v37 = vld [vmem:[#allocation2 + $0x128] sm:$0xff]
    %v38 = vld [vmem:[#allocation2 + $0x158] sm:$0xff]
    %v39 = vld [vmem:[#allocation2 + $0x188] sm:$0xff]
    %v40 = vld [vmem:[#allocation2 + $0x1b8] sm:$0xff]
    %v41 = vld [vmem:[#allocation2 + $0x1e8] sm:$0xff]
    %v42 = vld [vmem:[#allocation2 + $0x218] sm:$0xff]
    %v43 = vld [vmem:[#allocation2 + $0x248] sm:$0xff]
    %v44 = vld [vmem:[#allocation2 + $0x278] sm:$0xff]
    %v45 = vld [vmem:[#allocation2 + $0x2a8] sm:$0xff]
    %v46 = vld [vmem:[#allocation2 + $0x2d8] sm:$0xff]
    %v47 = vld [vmem:[#allocation2 + $0x10] sm:$0xff]
    %v48 = vld [vmem:[#allocation2 + $0x40] sm:$0xff]
    %v49 = vld [vmem:[#allocation2 + $0x70] sm:$0xff]
    %v50 = vld [vmem:[#allocation2 + $0xa0] sm:$0xff]
    %v51 = vld [vmem:[#allocation2 + $0xd0] sm:$0xff]
    %v52 = vld [vmem:[#allocation2 + $0x100] sm:$0xff]
    %v53 = vld [vmem:[#allocation2 + $0x130] sm:$0xff]
    %v54 = vld [vmem:[#allocation2 + $0x160] sm:$0xff]
    %v55 = vld [vmem:[#allocation2 + $0x190] sm:$0xff]
    %v56 = vld [vmem:[#allocation2 + $0x1c0] sm:$0xff]
    %v57 = vld [vmem:[#allocation2 + $0x1f0] sm:$0xff]
    %v58 = vld [vmem:[#allocation2 + $0x220] sm:$0xff]
    %v59 = vld [vmem:[#allocation2 + $0x250] sm:$0xff]
    %v60 = vld [vmem:[#allocation2 + $0x280] sm:$0xff]
    %v61 = vld [vmem:[#allocation2 + $0x2b0] sm:$0xff]
    %v62 = vld [vmem:[#allocation2 + $0x2e0] sm:$0xff]
    %v63 = vld [vmem:[#allocation2 + $0x18] sm:$0xff]
    %v64 = vld [vmem:[#allocation2 + $0x48] sm:$0xff]
    %v65 = vld [vmem:[#allocation2 + $0x78] sm:$0xff]
    %v66 = vld [vmem:[#allocation2 + $0xa8] sm:$0xff]
    %v67 = vld [vmem:[#allocation2 + $0xd8] sm:$0xff]
    %v68 = vld [vmem:[#allocation2 + $0x108] sm:$0xff]
    %v69 = vld [vmem:[#allocation2 + $0x138] sm:$0xff]
    %v70 = vld [vmem:[#allocation2 + $0x168] sm:$0xff]
    %v71 = vld [vmem:[#allocation2 + $0x198] sm:$0xff]
    %v72 = vld [vmem:[#allocation2 + $0x1c8] sm:$0xff]
    %v73 = vld [vmem:[#allocation2 + $0x1f8] sm:$0xff]
    %v74 = vld [vmem:[#allocation2 + $0x228] sm:$0xff]
    %v75 = vld [vmem:[#allocation2 + $0x258] sm:$0xff]
    %v76 = vld [vmem:[#allocation2 + $0x288] sm:$0xff]
    %v77 = vld [vmem:[#allocation2 + $0x2b8] sm:$0xff]
    %v78 = vld [vmem:[#allocation2 + $0x2e8] sm:$0xff]
    %v79 = vld [vmem:[#allocation2 + $0x20] sm:$0xff]
    %v80 = vld [vmem:[#allocation2 + $0x50] sm:$0xff]
    %v81 = vld [vmem:[#allocation2 + $0x80] sm:$0xff]
    %v82 = vld [vmem:[#allocation2 + $0xb0] sm:$0xff]
    %v83 = vld [vmem:[#allocation2 + $0xe0] sm:$0xff]
    %v84 = vld [vmem:[#allocation2 + $0x110] sm:$0xff]
    %v85 = vld [vmem:[#allocation2 + $0x140] sm:$0xff]
    %v86 = vld [vmem:[#allocation2 + $0x170] sm:$0xff]
    %v87 = vld [vmem:[#allocation2 + $0x1a0] sm:$0xff]
    %v88 = vld [vmem:[#allocation2 + $0x1d0] sm:$0xff]
    %v89 = vld [vmem:[#allocation2 + $0x200] sm:$0xff]
    %v90 = vld [vmem:[#allocation2 + $0x230] sm:$0xff]
    %v91 = vld [vmem:[#allocation2 + $0x260] sm:$0xff]
    %v92 = vld [vmem:[#allocation2 + $0x290] sm:$0xff]
    %v93 = vld [vmem:[#allocation2 + $0x2c0] sm:$0xff]
    %v94 = vld [vmem:[#allocation2 + $0x2f0] sm:$0xff]
    %v95 = vld [vmem:[#allocation2 + $0x28] ss:$0 sm:$0xff]
    %v96 = vld [vmem:[#allocation2 + $0x29] ss:$0 sm:$0xff]
    %v97 = vld [vmem:[#allocation2 + $0x2a] ss:$0 sm:$0xff]
    %v98 = vld [vmem:[#allocation2 + $0x2b] ss:$0 sm:$0xff]
    %v99 = vld [vmem:[#allocation2 + $0x2c] ss:$0 sm:$0xff]
    %v100 = vld [vmem:[#allocation2 + $0x2d] ss:$0 sm:$0xff]
    %v101 = vld [vmem:[%s0] sm:$0xff]
    %v102 = vld [vmem:[%s0 + $0x8] sm:$0xff]
    %v103 = vld [vmem:[%s0 + $0x10] sm:$0xff]
    %v104 = vld [vmem:[%s0 + $0x18] sm:$0xff]
    %v105 = vld [vmem:[%s0 + $0x20] sm:$0xff]
    %v106 = vld [vmem:[%s0 + $0x28] sm:$0xff]
    %v107 = vld [vmem:[%s0 + $0x30] sm:$0xff]
    %v108 = vld [vmem:[%s0 + $0x38] sm:$0xff]
    %vm109 = vcmask 64512
    %v111 = vsel %vm109, %v101, 0
    %v114 = vsel %vm109, %v102, 0
    %v117 = vsel %vm109, %v103, 0
    %v120 = vsel %vm109, %v104, 0
    %v123 = vsel %vm109, %v105, 0
    %v126 = vsel %vm109, %v106, 0
    %v129 = vsel %vm109, %v107, 0
    %v132 = vsel %vm109, %v108, 0
    %134 = vmatpush.msra.mxu0 0.0
    %135 = vmatpush.msra.mxu0 0.0
    %136 = vmatpush.msra.mxu0 0.0
    %137 = vmatpush.msra.mxu0 0.0
    %138 = vmatpush.msra.mxu0 0.0
    %139 = vmatpush.msra.mxu0 0.0
    %140 = vmatpush.msra.mxu0 0.0
    %141 = vmatpush.msra.mxu0 0.0
    %142 = vmatpush.msra.mxu0 0.0
    %143 = vmatpush.msra.mxu0 0.0
    %144 = vmatpush.msra.mxu0 0.0
    %145 = vmatpush.msra.mxu0 0.0
    %146 = vmatpush.msra.mxu0 0.0
    %147 = vmatpush.msra.mxu0 0.0
    %148 = vmatpush.msra.mxu0 0.0
    %149 = vmatpush.msra.mxu0 %v30
    %150 = vmatmul.f32.gmra.mxu0 %v111
    %v151 = vpop.f32.mrf.mxu0
    %v152 = vadd.f32 %v95, %v151
    %153 = vmatmul.f32.gmra.mxu0 %v114
    %v154 = vpop.f32.mrf.mxu0
    %v155 = vadd.f32 %v95, %v154
    %156 = vmatmul.f32.gmra.mxu0 %v117
    %v157 = vpop.f32.mrf.mxu0
    %v158 = vadd.f32 %v95, %v157
    %159 = vmatmul.f32.gmra.mxu0 %v120
    %v160 = vpop.f32.mrf.mxu0
    %v161 = vadd.f32 %v95, %v160
    %162 = vmatmul.f32.gmra.mxu0 %v123
    %v163 = vpop.f32.mrf.mxu0
    %v164 = vadd.f32 %v95, %v163
    %165 = vmatmul.f32.gmra.mxu0 %v126
    %v166 = vpop.f32.mrf.mxu0
    %v167 = vadd.f32 %v95, %v166
    %168 = vmatmul.f32.gmra.mxu0 %v129
    %v169 = vpop.f32.mrf.mxu0
    %v170 = vadd.f32 %v95, %v169
    %171 = vmatmul.f32.gmra.mxu0 %v132
    %v172 = vpop.f32.mrf.mxu0
    %v173 = vadd.f32 %v95, %v172
    %174 = vdwg.mxu0
    %v175 = vld [vmem:[%s1] sm:$0xff]
    %176 = vmatpush.msra.mxu0 %v46
    %177 = vmatpush.msra.mxu0 %v45
    %178 = vmatpush.msra.mxu0 %v44
    %179 = vmatpush.msra.mxu0 %v43
    %180 = vmatpush.msra.mxu0 %v42
    %181 = vmatpush.msra.mxu0 %v41
    %182 = vmatpush.msra.mxu0 %v40
    %183 = vmatpush.msra.mxu0 %v39
    %184 = vmatpush.msra.mxu0 %v38
    %185 = vmatpush.msra.mxu0 %v37
    %186 = vmatpush.msra.mxu0 %v36
    %187 = vmatpush.msra.mxu0 %v35
    %188 = vmatpush.msra.mxu0 %v34
    %189 = vmatpush.msra.mxu0 %v33
    %190 = vmatpush.msra.mxu0 %v32
    %191 = vmatpush.msra.mxu0 %v31
    %192 = vmatmul.f32.gmra.mxu0 %v175
    %v193 = vpop.f32.mrf.mxu0
    %v194 = vadd.f32 0.0, %v193
    %195 = vdwg.mxu0
    %v196 = vadd.f32 %v152, %v194
    %v197 = vtanh.pop %v196
    %198 = vmatpush.msra.mxu0 %v46
    %199 = vmatpush.msra.mxu0 %v45
    %200 = vmatpush.msra.mxu0 %v44
    %201 = vmatpush.msra.mxu0 %v43
    %202 = vmatpush.msra.mxu0 %v42
    %203 = vmatpush.msra.mxu0 %v41
    %204 = vmatpush.msra.mxu0 %v40
    %205 = vmatpush.msra.mxu0 %v39
    %206 = vmatpush.msra.mxu0 %v38
    %207 = vmatpush.msra.mxu0 %v37
    %208 = vmatpush.msra.mxu0 %v36
    %209 = vmatpush.msra.mxu0 %v35
    %210 = vmatpush.msra.mxu0 %v34
    %211 = vmatpush.msra.mxu0 %v33
    %212 = vmatpush.msra.mxu0 %v32
    %213 = vmatpush.msra.mxu0 %v31
    %214 = vmatmul.f32.gmra.mxu0 %v197
    %v215 = vpop.f32.mrf.mxu0
    %v216 = vadd.f32 0.0, %v215
    %217 = vdwg.mxu0
    %v218 = vadd.f32 %v155, %v216
    %v219 = vtanh.pop %v218
    %220 = vmatpush.msra.mxu0 %v46
    %221 = vmatpush.msra.mxu0 %v45
    %222 = vmatpush.msra.mxu0 %v44
    %223 = vmatpush.msra.mxu0 %v43
    %224 = vmatpush.msra.mxu0 %v42
    %225 = vmatpush.msra.mxu0 %v41
    %226 = vmatpush.msra.mxu0 %v40
    %227 = vmatpush.msra.mxu0 %v39
    %228 = vmatpush.msra.mxu0 %v38
    %229 = vmatpush.msra.mxu0 %v37
    %230 = vmatpush.msra.mxu0 %v36
    %231 = vmatpush.msra.mxu0 %v35
    %232 = vmatpush.msra.mxu0 %v34
    %233 = vmatpush.msra.mxu0 %v33
    %234 = vmatpush.msra.mxu0 %v32
    %235 = vmatpush.msra.mxu0 %v31
    %236 = vmatmul.f32.gmra.mxu0 %v219
    %v237 = vpop.f32.mrf.mxu0
    %v238 = vadd.f32 0.0, %v237
    %239 = vdwg.mxu0
    %v240 = vadd.f32 %v158, %v238
    %v241 = vtanh.pop %v240
    %242 = vmatpush.msra.mxu0 %v46
    %243 = vmatpush.msra.mxu0 %v45
    %244 = vmatpush.msra.mxu0 %v44
    %245 = vmatpush.msra.mxu0 %v43
    %246 = vmatpush.msra.mxu0 %v42
    %247 = vmatpush.msra.mxu0 %v41
    %248 = vmatpush.msra.mxu0 %v40
    %249 = vmatpush.msra.mxu0 %v39
    %250 = vmatpush.msra.mxu0 %v38
    %251 = vmatpush.msra.mxu0 %v37
    %252 = vmatpush.msra.mxu0 %v36
    %253 = vmatpush.msra.mxu0 %v35
    %254 = vmatpush.msra.mxu0 %v34
    %255 = vmatpush.msra.mxu0 %v33
    %256 = vmatpush.msra.mxu0 %v32
    %257 = vmatpush.msra.mxu0 %v31
    %258 = vmatmul.f32.gmra.mxu0 %v241
    %v259 = vpop.f32.mrf.mxu0
    %v260 = vadd.f32 0.0, %v259
    %261 = vdwg.mxu0
    %v262 = vadd.f32 %v161, %v260
    %v263 = vtanh.pop %v262
    %264 = vmatpush.msra.mxu0 %v46
    %265 = vmatpush.msra.mxu0 %v45
    %266 = vmatpush.msra.mxu0 %v44
    %267 = vmatpush.msra.mxu0 %v43
    %268 = vmatpush.msra.mxu0 %v42
    %269 = vmatpush.msra.mxu0 %v41
    %270 = vmatpush.msra.mxu0 %v40
    %271 = vmatpush.msra.mxu0 %v39
    %272 = vmatpush.msra.mxu0 %v38
    %273 = vmatpush.msra.mxu0 %v37
    %274 = vmatpush.msra.mxu0 %v36
    %275 = vmatpush.msra.mxu0 %v35
    %276 = vmatpush.msra.mxu0 %v34
    %277 = vmatpush.msra.mxu0 %v33
    %278 = vmatpush.msra.mxu0 %v32
    %279 = vmatpush.msra.mxu0 %v31
    %280 = vmatmul.f32.gmra.mxu0 %v263
    %v281 = vpop.f32.mrf.mxu0
    %v282 = vadd.f32 0.0, %v281
    %283 = vdwg.mxu0
    %v284 = vadd.f32 %v164, %v282
    %v285 = vtanh.pop %v284
    %286 = vmatpush.msra.mxu0 %v46
    %287 = vmatpush.msra.mxu0 %v45
    %288 = vmatpush.msra.mxu0 %v44
    %289 = vmatpush.msra.mxu0 %v43
    %290 = vmatpush.msra.mxu0 %v42
    %291 = vmatpush.msra.mxu0 %v41
    %292 = vmatpush.msra.mxu0 %v40
    %293 = vmatpush.msra.mxu0 %v39
    %294 = vmatpush.msra.mxu0 %v38
    %295 = vmatpush.msra.mxu0 %v37
    %296 = vmatpush.msra.mxu0 %v36
    %297 = vmatpush.msra.mxu0 %v35
    %298 = vmatpush.msra.mxu0 %v34
    %299 = vmatpush.msra.mxu0 %v33
    %300 = vmatpush.msra.mxu0 %v32
    %301 = vmatpush.msra.mxu0 %v31
    %302 = vmatmul.f32.gmra.mxu0 %v285
    %v303 = vpop.f32.mrf.mxu0
    %v304 = vadd.f32 0.0, %v303
    %305 = vdwg.mxu0
    %v306 = vadd.f32 %v167, %v304
    %v307 = vtanh.pop %v306
    %308 = vmatpush.msra.mxu0 %v46
    %309 = vmatpush.msra.mxu0 %v45
    %310 = vmatpush.msra.mxu0 %v44
    %311 = vmatpush.msra.mxu0 %v43
    %312 = vmatpush.msra.mxu0 %v42
    %313 = vmatpush.msra.mxu0 %v41
    %314 = vmatpush.msra.mxu0 %v40
    %315 = vmatpush.msra.mxu0 %v39
    %316 = vmatpush.msra.mxu0 %v38
    %317 = vmatpush.msra.mxu0 %v37
    %318 = vmatpush.msra.mxu0 %v36
    %319 = vmatpush.msra.mxu0 %v35
    %320 = vmatpush.msra.mxu0 %v34
    %321 = vmatpush.msra.mxu0 %v33
    %322 = vmatpush.msra.mxu0 %v32
    %323 = vmatpush.msra.mxu0 %v31
    %324 = vmatmul.f32.gmra.mxu0 %v307
    %v325 = vpop.f32.mrf.mxu0
    %v326 = vadd.f32 0.0, %v325
    %327 = vdwg.mxu0
    %v328 = vadd.f32 %v170, %v326
    %v329 = vtanh.pop %v328
    %330 = vmatpush.msra.mxu0 %v46
    %331 = vmatpush.msra.mxu0 %v45
    %332 = vmatpush.msra.mxu0 %v44
    %333 = vmatpush.msra.mxu0 %v43
    %334 = vmatpush.msra.mxu0 %v42
    %335 = vmatpush.msra.mxu0 %v41
    %336 = vmatpush.msra.mxu0 %v40
    %337 = vmatpush.msra.mxu0 %v39
    %338 = vmatpush.msra.mxu0 %v38
    %339 = vmatpush.msra.mxu0 %v37
    %340 = vmatpush.msra.mxu0 %v36
    %341 = vmatpush.msra.mxu0 %v35
    %342 = vmatpush.msra.mxu0 %v34
    %343 = vmatpush.msra.mxu0 %v33
    %344 = vmatpush.msra.mxu0 %v32
    %345 = vmatpush.msra.mxu0 %v31
    %346 = vmatmul.f32.gmra.mxu0 %v329
    %v347 = vpop.f32.mrf.mxu0
    %v348 = vadd.f32 0.0, %v347
    %349 = vdwg.mxu0
    %v350 = vadd.f32 %v173, %v348
    %v351 = vtanh.pop %v350
    %352 = vmatpush.msra.mxu0 %v62
    %353 = vmatpush.msra.mxu0 %v61
    %354 = vmatpush.msra.mxu0 %v60
    %355 = vmatpush.msra.mxu0 %v59
    %356 = vmatpush.msra.mxu0 %v58
    %357 = vmatpush.msra.mxu0 %v57
    %358 = vmatpush.msra.mxu0 %v56
    %359 = vmatpush.msra.mxu0 %v55
    %360 = vmatpush.msra.mxu0 %v54
    %361 = vmatpush.msra.mxu0 %v53
    %362 = vmatpush.msra.mxu0 %v52
    %363 = vmatpush.msra.mxu0 %v51
    %364 = vmatpush.msra.mxu0 %v50
    %365 = vmatpush.msra.mxu0 %v49
    %366 = vmatpush.msra.mxu0 %v48
    %367 = vmatpush.msra.mxu0 %v47
    %368 = vmatmul.f32.gmra.mxu0 %v351
    %v369 = vpop.f32.mrf.mxu0
    %v370 = vadd.f32 %v96, %v369
    %371 = vdwg.mxu0
    %v372 = vmax.f32 %v370, 0.0
    %373 = vmatpush.msra.mxu0 %v78
    %374 = vmatpush.msra.mxu0 %v77
    %375 = vmatpush.msra.mxu0 %v76
    %376 = vmatpush.msra.mxu0 %v75
    %377 = vmatpush.msra.mxu0 %v74
    %378 = vmatpush.msra.mxu0 %v73
    %379 = vmatpush.msra.mxu0 %v72
    %380 = vmatpush.msra.mxu0 %v71
    %381 = vmatpush.msra.mxu0 %v70
    %382 = vmatpush.msra.mxu0 %v69
    %383 = vmatpush.msra.mxu0 %v68
    %384 = vmatpush.msra.mxu0 %v67
    %385 = vmatpush.msra.mxu0 %v66
    %386 = vmatpush.msra.mxu0 %v65
    %387 = vmatpush.msra.mxu0 %v64
    %388 = vmatpush.msra.mxu0 %v63
    %389 = vmatmul.f32.gmra.mxu0 %v372
    %v390 = vpop.f32.mrf.mxu0
    %v391 = vadd.f32 %v97, %v390
    %392 = vdwg.mxu0
    %v393 = vmax.f32 %v391, 0.0
    %394 = vmatpush.msra.mxu0 %v94
    %395 = vmatpush.msra.mxu0 %v93
    %396 = vmatpush.msra.mxu0 %v92
    %397 = vmatpush.msra.mxu0 %v91
    %398 = vmatpush.msra.mxu0 %v90
    %399 = vmatpush.msra.mxu0 %v89
    %400 = vmatpush.msra.mxu0 %v88
    %401 = vmatpush.msra.mxu0 %v87
    %402 = vmatpush.msra.mxu0 %v86
    %403 = vmatpush.msra.mxu0 %v85
    %404 = vmatpush.msra.mxu0 %v84
    %405 = vmatpush.msra.mxu0 %v83
    %406 = vmatpush.msra.mxu0 %v82
    %407 = vmatpush.msra.mxu0 %v81
    %408 = vmatpush.msra.mxu0 %v80
    %409 = vmatpush.msra.mxu0 %v79
    %410 = vmatmul.f32.gmra.mxu0 %v393
    %v411 = vpop.f32.mrf.mxu0
    %v412 = vadd.f32 %v98, %v411
    %413 = vdwg.mxu0
    %v414 = vmax.f32 %v412, 0.0
    %v415 = vmul.f32 %v414, %v99
    %v416 = vadd.f32 %v415, %v100
    %417 = vadd.xlane.f32.xlu0 %v416
    %v418 = vpop.xlane.xlu0 %417
    %vm419 = vcmask 7168
    %420 = vst.msk [vmem:[%s3] sm:$0xff] %vm419, %v418
    // Predicated region
    $region18: #{rnn_forward.1} parent=1 // pred_check
      _
    $region19: #{rnn_forward.1} parent=1 // pred_check_branch
      %422 = sbr.rel (0) target = $region21
    $region20: #{rnn_forward.1} parent=1 // pred_region
      _
    $region21: #{rnn_forward.1} parent=1 // pred_fallthru
      _
    // Predicated region
    $region22: #{rnn_forward.1} parent=1 // pred_check
      _
    $region23: #{rnn_forward.1} parent=1 // pred_check_branch
      %424 = sbr.rel (0) target = $region25
    $region24: #{rnn_forward.1} parent=1 // pred_region
      _
    $region25: #{rnn_forward.1} parent=1 // pred_fallthru
      _
    %425 = vsyncpa [#allocation3], 1

</llo_original>
